<compile_context>
chip_gen: v7x
topology: tpu7x:2x2x1
jax: 0.10.0
libtpu: 0.0.40
codegen_flags: <defaults>
</compile_context>

<pallas_src>
import jax
import jax.numpy as jnp
from jax.experimental import pallas as pl
from jax.experimental.pallas import tpu as pltpu

C1 = 0.01 ** 2
C2 = 0.03 ** 2


def _ssim_kernel(x_ref, y_ref, o_ref):
    # x_ref / y_ref / o_ref: (B, H, W) blocks.
    x = x_ref[...].astype(jnp.float32)
    y = y_ref[...].astype(jnp.float32)

    shape = x.shape
    ndim = len(shape)
    H, W = shape[-2], shape[-1]
    row_ax, col_ax = ndim - 2, ndim - 1

    # Boundary masks for the 1-pixel reflection.  Hoisted once and reused by
    # all five pooled quantities (JAX does not CSE broadcast_in_dim).
    col = jax.lax.broadcasted_iota(jnp.int32, shape, col_ax)
    row = jax.lax.broadcasted_iota(jnp.int32, shape, row_ax)
    col_first = col == 0
    col_last = col == (W - 1)
    row_first = row == 0
    row_last = row == (H - 1)

    def h3(a):
        # Horizontal reflective 3-tap sum.  Shifts run on the XLU via
        # pltpu.roll; the single reflected boundary column is fixed with one
        # select per direction, reusing the two rolled arrays.
        prev = pltpu.roll(a, shift=1, axis=col_ax)       # a[..., j-1] (wraps at 0)
        nxt = pltpu.roll(a, shift=W - 1, axis=col_ax)    # a[..., j+1] (== shift -1)
        left = jnp.where(col_first, nxt, prev)           # reflect: a[..., 1]   at j=0
        right = jnp.where(col_last, prev, nxt)           # reflect: a[..., W-2] at j=W-1
        return a + left + right

    def v3(a):
        # Vertical reflective 3-tap sum (sublane axis).
        prev = pltpu.roll(a, shift=1, axis=row_ax)       # a[..., i-1, :]
        nxt = pltpu.roll(a, shift=H - 1, axis=row_ax)    # a[..., i+1, :]
        up = jnp.where(row_first, nxt, prev)
        down = jnp.where(row_last, prev, nxt)
        return a + up + down

    def pool_sum(a):
        # ReflectionPad2d(1) + 3x3 *sum*; the 1/9 mean factor is folded into
        # the rescaled constants below and cancels in the SSIM ratio.
        return v3(h3(a))

    sx = pool_sum(x)
    sy = pool_sum(y)
    sxx = pool_sum(x * x)
    syy = pool_sum(y * y)
    sxy = pool_sum(x * y)

    # mu_* = s_*/9, sigma_* = s_**/9 - mu_*^2 ; the 1/81 factors in the
    # numerator and denominator cancel in the ratio, so work with raw sums.
    c1 = 81.0 * C1
    c2 = 81.0 * C2
    sx_sy = sx * sy
    sx2 = sx * sx
    sy2 = sy * sy
    num = (2.0 * sx_sy + c1) * (18.0 * sxy - 2.0 * sx_sy + c2)
    den = (sx2 + sy2 + c1) * (9.0 * (sxx + syy) - sx2 - sy2 + c2)

    # EUP reciprocal (free slot) + one Newton step instead of a VPU divide.
    r = pl.reciprocal(den, approx=True)
    r = r * (2.0 - den * r)

    out = jnp.clip((1.0 - num * r) * 0.5, 0.0, 1.0)
    o_ref[...] = out.astype(o_ref.dtype)


def _vmem_capacity_bytes():
    """Trace-time VMEM capacity query; conservative (v7x) default if unknown."""
    try:
        info = pltpu.get_tpu_info()
        cap = getattr(info, "vmem_capacity_bytes", None) or getattr(
            info, "vmem_bytes", None)
        if cap:
            return int(cap)
    except Exception:
        pass
    return 64 * 1024 * 1024


def _choose_block_batch(nc, bytes_per_img, budget):
    """Images per grid step.

    Prefer the largest divisor of nc whose block fits the budget while the
    grid keeps an even number of >= 8 steps (pipeline overlap + clean split
    across v7x's two TensorCores); fall back to >= 2 even steps, then to the
    largest fitting divisor.
    """
    b_max = max(1, budget // max(1, bytes_per_img))
    divisors = [d for d in range(1, nc + 1) if nc % d == 0]
    cand = [d for d in divisors if d <= b_max] or [1]
    for min_steps in (8, 2):
        good = [d for d in cand if (nc // d) >= min_steps and (nc // d) % 2 == 0]
        if good:
            return max(good)
    return max(cand)


def ssim(x, y):
    """SSIM dissimilarity map matching the PyTorch SSIM module.

    x, y: (N, C, H, W) arrays.  Returns (N, C, H, W) in x.dtype.
    """
    N, C, H, W = x.shape
    assert H >= 2 and W >= 2, "ReflectionPad2d(1) requires H >= 2 and W >= 2"
    nc = N * C
    xf = x.reshape(nc, H, W)
    yf = y.reshape(nc, H, W)

    # Generation-aware VMEM budgets: v7x has 64 MiB per TensorCore, v5e/v6e
    # have 128 MiB.  Leave headroom for compiler temporaries.
    cap = _vmem_capacity_bytes()
    if cap <= 64 * 1024 * 1024:
        block_budget, vmem_limit = 14 * 1024 * 1024, 40 * 1024 * 1024
    else:
        block_budget, vmem_limit = 40 * 1024 * 1024, 96 * 1024 * 1024

    # Per-image working set: double-buffered native-dtype I/O (2 in + 1 out)
    # plus ~16 live f32 full-block intermediates inside the body.
    itemsize = x.dtype.itemsize
    bytes_per_img = (6 * itemsize + 16 * 4) * H * W

    B = _choose_block_batch(nc, bytes_per_img, block_budget)
    grid = (nc // B,)

    # Very large single frames (B == 1 still over budget): raise the scoped
    # limit toward the physical cap rather than silently overflowing.
    block_bytes = bytes_per_img * B
    if block_bytes > block_budget:
        vmem_limit = max(vmem_limit, min(cap - 12 * 1024 * 1024, 2 * block_bytes))

    out = pl.pallas_call(
        _ssim_kernel,
        out_shape=jax.ShapeDtypeStruct((nc, H, W), x.dtype),
        grid_spec=pltpu.PrefetchScalarGridSpec(
            num_scalar_prefetch=0,
            grid=grid,
            in_specs=[
                pl.BlockSpec((B, H, W), lambda i: (i, 0, 0)),
                pl.BlockSpec((B, H, W), lambda i: (i, 0, 0)),
            ],
            out_specs=pl.BlockSpec((B, H, W), lambda i: (i, 0, 0)),
        ),
        compiler_params=pltpu.CompilerParams(
            dimension_semantics=("parallel",),
            vmem_limit_bytes=int(vmem_limit),
        ),
    )(xf, yf)

    return out.reshape(N, C, H, W)


def _ssim_ref(x, y):
    """Pure-JAX reference matching the PyTorch module (pad + 9-tap pool)."""
    xp = jnp.pad(x, ((0, 0), (0, 0), (1, 1), (1, 1)), mode="reflect")
    yp = jnp.pad(y, ((0, 0), (0, 0), (1, 1), (1, 1)), mode="reflect")
    H, W = x.shape[2], x.shape[3]

    def pool(a):
        s = jnp.zeros(x.shape, jnp.float32)
        for di in range(3):
            for dj in range(3):
                s = s + a[:, :, di:di + H, dj:dj + W]
        return s / 9.0

    mu_x = pool(xp)
    mu_y = pool(yp)
    sigma_x = pool(xp * xp) - mu_x * mu_x
    sigma_y = pool(yp * yp) - mu_y * mu_y
    sigma_xy = pool(xp * yp) - mu_x * mu_y
    n = (2 * mu_x * mu_y + C1) * (2 * sigma_xy + C2)
    d = (mu_x ** 2 + mu_y ** 2 + C1) * (sigma_x + sigma_y + C2)
    return jnp.clip((1 - n / d) / 2, 0.0, 1.0)


if __name__ == "__main__":
    key = jax.random.PRNGKey(0)
    kx, ky = jax.random.split(key)
    N, C, H, W = 2, 4, 16, 16
    x = jax.random.uniform(kx, (N, C, H, W), dtype=jnp.float32)
    y = jax.random.uniform(ky, (N, C, H, W), dtype=jnp.float32)

    out = ssim(x, y)
    out = jax.block_until_ready(out)

    ref = _ssim_ref(x, y)
    assert out.shape == (N, C, H, W)
    assert jnp.allclose(out, ref, atol=1e-5, rtol=1e-5), (
        float(jnp.max(jnp.abs(out - ref)))
    )
    print("KERNEL_OK")
</pallas_src>

<mosaic_0001>
module attributes {stable_mosaic.version = 11 : i64} {
  func.func @_ssim_kernel(%arg0: i32, %arg1: memref<1x16x16xf32, #tpu.memory_space<vmem>>, %arg2: memref<1x16x16xf32, #tpu.memory_space<vmem>>, %arg3: memref<1x16x16xf32, #tpu.memory_space<vmem>>) attributes {dimension_semantics = [#tpu.dimension_semantics<parallel>], iteration_bounds = array<i64: 8>, scalar_prefetch = 0 : i64, scratch_operands = 0 : i64, tpu.core_type = #tpu.core_type<tc>, window_params = [{transform_indices = @transform_0, window_bounds = array<i64: 1, 16, 16>}, {transform_indices = @transform_1, window_bounds = array<i64: 1, 16, 16>}, {transform_indices = @transform_2, window_bounds = array<i64: 1, 16, 16>}]} {
    %c0 = arith.constant 0 : index
    %c0_0 = arith.constant 0 : index
    %c0_1 = arith.constant 0 : index
    %0 = vector.load %arg1[%c0, %c0_0, %c0_1] : memref<1x16x16xf32, #tpu.memory_space<vmem>>, vector<1x16x16xf32>
    %c0_2 = arith.constant 0 : index
    %c0_3 = arith.constant 0 : index
    %c0_4 = arith.constant 0 : index
    %1 = vector.load %arg2[%c0_2, %c0_3, %c0_4] : memref<1x16x16xf32, #tpu.memory_space<vmem>>, vector<1x16x16xf32>
    %2 = tpu.iota {dimensions = array<i32: 2>} : vector<1x16x16xi32>
    %3 = tpu.iota {dimensions = array<i32: 1>} : vector<1x16x16xi32>
    %c0_i32 = arith.constant 0 : i32
    %4 = vector.broadcast %c0_i32 : i32 to vector<1x16x16xi32>
    %5 = arith.cmpi eq, %2, %4 : vector<1x16x16xi32>
    %c15_i32 = arith.constant 15 : i32
    %6 = vector.broadcast %c15_i32 : i32 to vector<1x16x16xi32>
    %7 = arith.cmpi eq, %2, %6 : vector<1x16x16xi32>
    %c0_i32_5 = arith.constant 0 : i32
    %8 = vector.broadcast %c0_i32_5 : i32 to vector<1x16x16xi32>
    %9 = arith.cmpi eq, %3, %8 : vector<1x16x16xi32>
    %c15_i32_6 = arith.constant 15 : i32
    %10 = vector.broadcast %c15_i32_6 : i32 to vector<1x16x16xi32>
    %11 = arith.cmpi eq, %3, %10 : vector<1x16x16xi32>
    %c1_i32 = arith.constant 1 : i32
    %12 = tpu.dynamic_rotate %0 by %c1_i32 dim 2 : vector<1x16x16xf32>, i32 -> vector<1x16x16xf32>
    %c15_i32_7 = arith.constant 15 : i32
    %13 = tpu.dynamic_rotate %0 by %c15_i32_7 dim 2 : vector<1x16x16xf32>, i32 -> vector<1x16x16xf32>
    %14 = arith.select %5, %13, %12 : vector<1x16x16xi1>, vector<1x16x16xf32>
    %15 = arith.select %7, %12, %13 : vector<1x16x16xi1>, vector<1x16x16xf32>
    %16 = arith.addf %0, %14 : vector<1x16x16xf32>
    %17 = arith.addf %16, %15 : vector<1x16x16xf32>
    %c1_i32_8 = arith.constant 1 : i32
    %18 = tpu.dynamic_rotate %17 by %c1_i32_8 dim 1 : vector<1x16x16xf32>, i32 -> vector<1x16x16xf32>
    %c15_i32_9 = arith.constant 15 : i32
    %19 = tpu.dynamic_rotate %17 by %c15_i32_9 dim 1 : vector<1x16x16xf32>, i32 -> vector<1x16x16xf32>
    %20 = arith.select %9, %19, %18 : vector<1x16x16xi1>, vector<1x16x16xf32>
    %21 = arith.select %11, %18, %19 : vector<1x16x16xi1>, vector<1x16x16xf32>
    %22 = arith.addf %17, %20 : vector<1x16x16xf32>
    %23 = arith.addf %22, %21 : vector<1x16x16xf32>
    %c1_i32_10 = arith.constant 1 : i32
    %24 = tpu.dynamic_rotate %1 by %c1_i32_10 dim 2 : vector<1x16x16xf32>, i32 -> vector<1x16x16xf32>
    %c15_i32_11 = arith.constant 15 : i32
    %25 = tpu.dynamic_rotate %1 by %c15_i32_11 dim 2 : vector<1x16x16xf32>, i32 -> vector<1x16x16xf32>
    %26 = arith.select %5, %25, %24 : vector<1x16x16xi1>, vector<1x16x16xf32>
    %27 = arith.select %7, %24, %25 : vector<1x16x16xi1>, vector<1x16x16xf32>
    %28 = arith.addf %1, %26 : vector<1x16x16xf32>
    %29 = arith.addf %28, %27 : vector<1x16x16xf32>
    %c1_i32_12 = arith.constant 1 : i32
    %30 = tpu.dynamic_rotate %29 by %c1_i32_12 dim 1 : vector<1x16x16xf32>, i32 -> vector<1x16x16xf32>
    %c15_i32_13 = arith.constant 15 : i32
    %31 = tpu.dynamic_rotate %29 by %c15_i32_13 dim 1 : vector<1x16x16xf32>, i32 -> vector<1x16x16xf32>
    %32 = arith.select %9, %31, %30 : vector<1x16x16xi1>, vector<1x16x16xf32>
    %33 = arith.select %11, %30, %31 : vector<1x16x16xi1>, vector<1x16x16xf32>
    %34 = arith.addf %29, %32 : vector<1x16x16xf32>
    %35 = arith.addf %34, %33 : vector<1x16x16xf32>
    %36 = arith.mulf %0, %0 : vector<1x16x16xf32>
    %c1_i32_14 = arith.constant 1 : i32
    %37 = tpu.dynamic_rotate %36 by %c1_i32_14 dim 2 : vector<1x16x16xf32>, i32 -> vector<1x16x16xf32>
    %c15_i32_15 = arith.constant 15 : i32
    %38 = tpu.dynamic_rotate %36 by %c15_i32_15 dim 2 : vector<1x16x16xf32>, i32 -> vector<1x16x16xf32>
    %39 = arith.select %5, %38, %37 : vector<1x16x16xi1>, vector<1x16x16xf32>
    %40 = arith.select %7, %37, %38 : vector<1x16x16xi1>, vector<1x16x16xf32>
    %41 = arith.addf %36, %39 : vector<1x16x16xf32>
    %42 = arith.addf %41, %40 : vector<1x16x16xf32>
    %c1_i32_16 = arith.constant 1 : i32
    %43 = tpu.dynamic_rotate %42 by %c1_i32_16 dim 1 : vector<1x16x16xf32>, i32 -> vector<1x16x16xf32>
    %c15_i32_17 = arith.constant 15 : i32
    %44 = tpu.dynamic_rotate %42 by %c15_i32_17 dim 1 : vector<1x16x16xf32>, i32 -> vector<1x16x16xf32>
    %45 = arith.select %9, %44, %43 : vector<1x16x16xi1>, vector<1x16x16xf32>
    %46 = arith.select %11, %43, %44 : vector<1x16x16xi1>, vector<1x16x16xf32>
    %47 = arith.addf %42, %45 : vector<1x16x16xf32>
    %48 = arith.addf %47, %46 : vector<1x16x16xf32>
    %49 = arith.mulf %1, %1 : vector<1x16x16xf32>
    %c1_i32_18 = arith.constant 1 : i32
    %50 = tpu.dynamic_rotate %49 by %c1_i32_18 dim 2 : vector<1x16x16xf32>, i32 -> vector<1x16x16xf32>
    %c15_i32_19 = arith.constant 15 : i32
    %51 = tpu.dynamic_rotate %49 by %c15_i32_19 dim 2 : vector<1x16x16xf32>, i32 -> vector<1x16x16xf32>
    %52 = arith.select %5, %51, %50 : vector<1x16x16xi1>, vector<1x16x16xf32>
    %53 = arith.select %7, %50, %51 : vector<1x16x16xi1>, vector<1x16x16xf32>
    %54 = arith.addf %49, %52 : vector<1x16x16xf32>
    %55 = arith.addf %54, %53 : vector<1x16x16xf32>
    %c1_i32_20 = arith.constant 1 : i32
    %56 = tpu.dynamic_rotate %55 by %c1_i32_20 dim 1 : vector<1x16x16xf32>, i32 -> vector<1x16x16xf32>
    %c15_i32_21 = arith.constant 15 : i32
    %57 = tpu.dynamic_rotate %55 by %c15_i32_21 dim 1 : vector<1x16x16xf32>, i32 -> vector<1x16x16xf32>
    %58 = arith.select %9, %57, %56 : vector<1x16x16xi1>, vector<1x16x16xf32>
    %59 = arith.select %11, %56, %57 : vector<1x16x16xi1>, vector<1x16x16xf32>
    %60 = arith.addf %55, %58 : vector<1x16x16xf32>
    %61 = arith.addf %60, %59 : vector<1x16x16xf32>
    %62 = arith.mulf %0, %1 : vector<1x16x16xf32>
    %c1_i32_22 = arith.constant 1 : i32
    %63 = tpu.dynamic_rotate %62 by %c1_i32_22 dim 2 : vector<1x16x16xf32>, i32 -> vector<1x16x16xf32>
    %c15_i32_23 = arith.constant 15 : i32
    %64 = tpu.dynamic_rotate %62 by %c15_i32_23 dim 2 : vector<1x16x16xf32>, i32 -> vector<1x16x16xf32>
    %65 = arith.select %5, %64, %63 : vector<1x16x16xi1>, vector<1x16x16xf32>
    %66 = arith.select %7, %63, %64 : vector<1x16x16xi1>, vector<1x16x16xf32>
    %67 = arith.addf %62, %65 : vector<1x16x16xf32>
    %68 = arith.addf %67, %66 : vector<1x16x16xf32>
    %c1_i32_24 = arith.constant 1 : i32
    %69 = tpu.dynamic_rotate %68 by %c1_i32_24 dim 1 : vector<1x16x16xf32>, i32 -> vector<1x16x16xf32>
    %c15_i32_25 = arith.constant 15 : i32
    %70 = tpu.dynamic_rotate %68 by %c15_i32_25 dim 1 : vector<1x16x16xf32>, i32 -> vector<1x16x16xf32>
    %71 = arith.select %9, %70, %69 : vector<1x16x16xi1>, vector<1x16x16xf32>
    %72 = arith.select %11, %69, %70 : vector<1x16x16xi1>, vector<1x16x16xf32>
    %73 = arith.addf %68, %71 : vector<1x16x16xf32>
    %74 = arith.addf %73, %72 : vector<1x16x16xf32>
    %75 = arith.mulf %23, %35 : vector<1x16x16xf32>
    %76 = arith.mulf %23, %23 : vector<1x16x16xf32>
    %77 = arith.mulf %35, %35 : vector<1x16x16xf32>
    %cst = arith.constant 2.000000e+00 : f32
    %78 = vector.broadcast %cst : f32 to vector<1x16x16xf32>
    %79 = arith.mulf %78, %75 : vector<1x16x16xf32>
    %cst_26 = arith.constant 8.100000e-03 : f32
    %80 = vector.broadcast %cst_26 : f32 to vector<1x16x16xf32>
    %81 = arith.addf %79, %80 : vector<1x16x16xf32>
    %cst_27 = arith.constant 1.800000e+01 : f32
    %82 = vector.broadcast %cst_27 : f32 to vector<1x16x16xf32>
    %83 = arith.mulf %82, %74 : vector<1x16x16xf32>
    %cst_28 = arith.constant 2.000000e+00 : f32
    %84 = vector.broadcast %cst_28 : f32 to vector<1x16x16xf32>
    %85 = arith.mulf %84, %75 : vector<1x16x16xf32>
    %86 = arith.subf %83, %85 : vector<1x16x16xf32>
    %cst_29 = arith.constant 7.290000e-02 : f32
    %87 = vector.broadcast %cst_29 : f32 to vector<1x16x16xf32>
    %88 = arith.addf %86, %87 : vector<1x16x16xf32>
    %89 = arith.mulf %81, %88 : vector<1x16x16xf32>
    %90 = arith.addf %76, %77 : vector<1x16x16xf32>
    %cst_30 = arith.constant 8.100000e-03 : f32
    %91 = vector.broadcast %cst_30 : f32 to vector<1x16x16xf32>
    %92 = arith.addf %90, %91 : vector<1x16x16xf32>
    %93 = arith.addf %48, %61 : vector<1x16x16xf32>
    %cst_31 = arith.constant 9.000000e+00 : f32
    %94 = vector.broadcast %cst_31 : f32 to vector<1x16x16xf32>
    %95 = arith.mulf %94, %93 : vector<1x16x16xf32>
    %96 = arith.subf %95, %76 : vector<1x16x16xf32>
    %97 = arith.subf %96, %77 : vector<1x16x16xf32>
    %cst_32 = arith.constant 7.290000e-02 : f32
    %98 = vector.broadcast %cst_32 : f32 to vector<1x16x16xf32>
    %99 = arith.addf %97, %98 : vector<1x16x16xf32>
    %100 = arith.mulf %92, %99 : vector<1x16x16xf32>
    %101 = tpu.reciprocal %100 {approx = true} : vector<1x16x16xf32> -> vector<1x16x16xf32>
    %102 = arith.mulf %100, %101 : vector<1x16x16xf32>
    %cst_33 = arith.constant 2.000000e+00 : f32
    %103 = vector.broadcast %cst_33 : f32 to vector<1x16x16xf32>
    %104 = arith.subf %103, %102 : vector<1x16x16xf32>
    %105 = arith.mulf %101, %104 : vector<1x16x16xf32>
    %106 = arith.mulf %89, %105 : vector<1x16x16xf32>
    %cst_34 = arith.constant 1.000000e+00 : f32
    %107 = vector.broadcast %cst_34 : f32 to vector<1x16x16xf32>
    %108 = arith.subf %107, %106 : vector<1x16x16xf32>
    %cst_35 = arith.constant 5.000000e-01 : f32
    %109 = vector.broadcast %cst_35 : f32 to vector<1x16x16xf32>
    %110 = arith.mulf %108, %109 : vector<1x16x16xf32>
    %cst_36 = arith.constant 0.000000e+00 : f32
    %cst_37 = arith.constant 1.000000e+00 : f32
    %111 = vector.broadcast %cst_36 : f32 to vector<1x16x16xf32>
    %112 = arith.maximumf %111, %110 : vector<1x16x16xf32>
    %113 = vector.broadcast %cst_37 : f32 to vector<1x16x16xf32>
    %114 = arith.minimumf %113, %112 : vector<1x16x16xf32>
    %c0_38 = arith.constant 0 : index
    %c0_39 = arith.constant 0 : index
    %c0_40 = arith.constant 0 : index
    %115 = vector.load %arg3[%c0_38, %c0_39, %c0_40] : memref<1x16x16xf32, #tpu.memory_space<vmem>>, vector<1x16x16xf32>
    tpu.vector_store %arg3[%c0_38, %c0_39, %c0_40], %114 {strides = array<i32>} : memref<1x16x16xf32, #tpu.memory_space<vmem>>, vector<1x16x16xf32>,
    return
  }
  func.func @transform_0(%arg0: i32) -> (i32, i32, i32) {
    %c0_i32 = arith.constant 0 : i32
    %c0_i32_0 = arith.constant 0 : i32
    %c0_i32_1 = arith.constant 0 : i32
    return %arg0, %c0_i32, %c0_i32_0 : i32, i32, i32
  }
  func.func @transform_1(%arg0: i32) -> (i32, i32, i32) {
    %c0_i32 = arith.constant 0 : i32
    %c0_i32_0 = arith.constant 0 : i32
    %c0_i32_1 = arith.constant 0 : i32
    return %arg0, %c0_i32, %c0_i32_0 : i32, i32, i32
  }
  func.func @transform_2(%arg0: i32) -> (i32, i32, i32) {
    %c0_i32 = arith.constant 0 : i32
    %c0_i32_0 = arith.constant 0 : i32
    %c0_i32_1 = arith.constant 0 : i32
    return %arg0, %c0_i32, %c0_i32_0 : i32, i32, i32
  }
}

</mosaic_0001>

<llo_original>
// kernel: tpu_custom_call.1
$region0: #{tpu_custom_call.1}
  #allocation0 [shape = 'u32[]', space=smem, size = 0x4, offset = 0x4, fixed_abs, tag = 'smem constant byte address 0x4 - core index']
  #allocation1 [shape = 'u32[144,128]{1,0:T(1,128)}', space=vmem, size = 0x12000, scoped, tag = 'internal scratch']
  %s0 = inlined_call_operand.hbm [shape: f32[8,16,16], index: 0, kind: input, shape index: {}]
  %s1 = inlined_call_operand.hbm [shape: f32[8,16,16], index: 1, kind: input, shape index: {}]
  %s2 = inlined_call_operand.hbm [shape: f32[8,16,16], index: 2, kind: output, shape index: {}]
  %s3 = sld [smem:[#allocation0]]
  $region49: #{tpu_custom_call.1} parent=0
    _
  %s5 = ssub.s32 1, %s3
  %s6 = scalar_select 0, %s5, %s3
  $region1: #{tpu_custom_call.1} parent=0
    #allocation2 [shape = 'u8[16384]{0}', space=vmem, size = 0x4000, scoped, tag = 'input window, operand 0']
    #allocation3 [shape = 's32[2]{0}', space=sflag, size = 0x8, scoped, tag = 'scoped memory for tpu_custom_call.1']
    #allocation4 [shape = 's32[2]{0}', space=sflag, size = 0x8, scoped, tag = 'scoped memory for tpu_custom_call.1']
    #allocation5 [shape = 'u8[16384]{0}', space=vmem, size = 0x4000, scoped, tag = 'input window, operand 1']
    #allocation6 [shape = 's32[2]{0}', space=sflag, size = 0x8, scoped, tag = 'scoped memory for tpu_custom_call.1']
    #allocation7 [shape = 'u8[16384]{0}', space=vmem, size = 0x4000, scoped, tag = 'output window, operand 0']
    %7 = vsyncpa [#allocation3], 0
    %s8 = scalar_lea.sflag [#allocation3], 1
    %9 = vsyncpa %s8, 0
    %10 = vsyncpa [#allocation6], 0
    %s11 = scalar_lea.sflag [#allocation6], 1
    %12 = vsyncpa %s11, 0
    %13 = vsyncpa [#allocation4], 0
    %s14 = scalar_lea.sflag [#allocation4], 1
    %15 = vsyncpa %s14, 0
    loop: start=0, step=1, limit=10
    $region2: #{tpu_custom_call.1} parent=1 // loop_pre_header
      _
    $region3: #{tpu_custom_call.1} parent=1 // loop_header
      %s17 = sphi 0, %s21
      %p18 = scmp.ge.s32.totalorder %s17, 10
      %s27 = sphi 0, %s29
      %s30 = sphi 0, %s27
      %s31 = sphi 0, %s30
      %s47 = sphi 0, %s31
      %s53 = sphi 0, %s55
      %s56 = sphi 0, %s53
      %s57 = sphi 0, %s56
      %s73 = sphi 0, %s57
      %s79 = sphi 0, %s81
      %s82 = sphi 0, %s79
      %s83 = sphi 0, %s82
      %s99 = sphi 0, %s83
    $region4: #{tpu_custom_call.1} parent=1 // loop_header_branch
      %20 = sbr.rel (%p18) target = $region8
    $region5: #{tpu_custom_call.1} parent=1 // loop_body
      %s22 = ssub.s32 %s17, 1
      %s23 = ssub.s32 %s17, 2
      %s24 = sadd.s32 %s17, 1
      %s25 = ssub.s32 %s17, %s24
      %p26 = scmp.eq.s32.totalorder %s25, 0
      %s28 = sadd.s32 %s27, 1
      %s29 = scalar_select %p26, %s27, %s28
      %p32 = pneg %p26
      %p33 = scmp.eq.s32.totalorder %s17, 7
      %p34 = por %p32, %p33
      %p35 = scmp.ne.s32.totalorder %s27, %s30
      %p36 = scmp.eq.s32.totalorder %s17, 0
      %p37 = por %p35, %p36
      %p38 = scmp.ne.s32.totalorder %s27, %s30
      %p39 = scmp.eq.s32.totalorder %s22, 7
      %p40 = por %p38, %p39
      %p41 = scmp.ne.s32.totalorder %s30, %s31
      %p42 = scmp.eq.s32.totalorder %s22, 0
      %p43 = por %p41, %p42
      %p44 = scmp.ne.s32.totalorder %s30, %s31
      %p45 = scmp.eq.s32.totalorder %s23, 7
      %p46 = por %p44, %p45
      %p48 = scmp.ne.s32.totalorder %s31, %s47
      %p49 = scmp.eq.s32.totalorder %s23, 0
      %p50 = por %p48, %p49
      %s51 = ssub.s32 %s17, %s24
      %p52 = scmp.eq.s32.totalorder %s51, 0
      %s54 = sadd.s32 %s53, 1
      %s55 = scalar_select %p52, %s53, %s54
      %p58 = pneg %p52
      %p59 = scmp.eq.s32.totalorder %s17, 7
      %p60 = por %p58, %p59
      %p61 = scmp.ne.s32.totalorder %s53, %s56
      %p62 = scmp.eq.s32.totalorder %s17, 0
      %p63 = por %p61, %p62
      %p64 = scmp.ne.s32.totalorder %s53, %s56
      %p65 = scmp.eq.s32.totalorder %s22, 7
      %p66 = por %p64, %p65
      %p67 = scmp.ne.s32.totalorder %s56, %s57
      %p68 = scmp.eq.s32.totalorder %s22, 0
      %p69 = por %p67, %p68
      %p70 = scmp.ne.s32.totalorder %s56, %s57
      %p71 = scmp.eq.s32.totalorder %s23, 7
      %p72 = por %p70, %p71
      %p74 = scmp.ne.s32.totalorder %s57, %s73
      %p75 = scmp.eq.s32.totalorder %s23, 0
      %p76 = por %p74, %p75
      %s77 = ssub.s32 %s17, %s24
      %p78 = scmp.eq.s32.totalorder %s77, 0
      %s80 = sadd.s32 %s79, 1
      %s81 = scalar_select %p78, %s79, %s80
      %p84 = pneg %p78
      %p85 = scmp.eq.s32.totalorder %s17, 7
      %p86 = por %p84, %p85
      %p87 = scmp.ne.s32.totalorder %s79, %s82
      %p88 = scmp.eq.s32.totalorder %s17, 0
      %p89 = por %p87, %p88
      %p90 = scmp.ne.s32.totalorder %s79, %s82
      %p91 = scmp.eq.s32.totalorder %s22, 7
      %p92 = por %p90, %p91
      %p93 = scmp.ne.s32.totalorder %s82, %s83
      %p94 = scmp.eq.s32.totalorder %s22, 0
      %p95 = por %p93, %p94
      %p96 = scmp.ne.s32.totalorder %s82, %s83
      %p97 = scmp.eq.s32.totalorder %s23, 7
      %p98 = por %p96, %p97
      %p100 = scmp.ne.s32.totalorder %s83, %s99
      %p101 = scmp.eq.s32.totalorder %s23, 0
      %p102 = por %p100, %p101
      %p103 = scmp.le.s32.totalorder 1, %s17
      %p104 = scmp.lt.s32.totalorder %s17, 9
      %p105 = pnand %p103, %p104
      %p106 = pneg %p105
      // Predicated region
      $region9: #{tpu_custom_call.1} parent=5 // pred_check
        _
      $region10: #{tpu_custom_call.1} parent=5 // pred_check_branch
        %108 = sbr.rel (%p105) target = $region12
      $region11: #{tpu_custom_call.1} parent=5 // pred_region
        %s109 = ssub.s32 %s17, 1
      $region12: #{tpu_custom_call.1} parent=5 // pred_fallthru
        _
      %p110 = scmp.lt.s32.totalorder %s17, 8
      // Predicated region
      $region13: #{tpu_custom_call.1} parent=5 // pred_check
        %p111 = pneg %p110
      $region14: #{tpu_custom_call.1} parent=5 // pred_check_branch
        %113 = sbr.rel (%p111) target = $region16
      $region15: #{tpu_custom_call.1} parent=5 // pred_region
        // Predicated region
        $region17: #{tpu_custom_call.1} parent=15 // pred_check
          %p114 = pneg %p37
        $region18: #{tpu_custom_call.1} parent=15 // pred_check_branch
          %116 = sbr.rel (%p114) target = $region20
        $region19: #{tpu_custom_call.1} parent=15 // pred_region
          %s117 = sand.u32 %s27, 1
          %s118 = scalar_lea.sflag [#allocation3], %s117
          %s119 = sand.u32 %s27, 1
          %s120 = smul.addr %s119, 16
          %s121 = scalar_lea.vmem [#allocation2], %s120
          %s123 = ssub.s32 256, 256
          %124 = vsyncadd %s118, %s123
          %s125 = smul.addr %s17, 2
          %s126 = smul.addr %s125, 128
          %s127 = scalar_lea.hbm %s0, %s126
          %s128 = sshll.u32 %s121, 4
          %s129 = int_to_ptr.vmem [resolvable:$true] %s128
          %134 = dma.hbm_to_vmem [thread:$0]  %s127, 256, %s129, %s118, 128, 128, 8
        $region20: #{tpu_custom_call.1} parent=15 // pred_fallthru
          _
        // Predicated region
        $region21: #{tpu_custom_call.1} parent=15 // pred_check
          %p135 = pneg %p63
        $region22: #{tpu_custom_call.1} parent=15 // pred_check_branch
          %137 = sbr.rel (%p135) target = $region24
        $region23: #{tpu_custom_call.1} parent=15 // pred_region
          %s138 = sand.u32 %s53, 1
          %s139 = scalar_lea.sflag [#allocation6], %s138
          %s140 = sand.u32 %s53, 1
          %s141 = smul.addr %s140, 16
          %s142 = scalar_lea.vmem [#allocation5], %s141
          %s144 = ssub.s32 256, 256
          %145 = vsyncadd %s139, %s144
          %s146 = smul.addr %s17, 2
          %s147 = smul.addr %s146, 128
          %s148 = scalar_lea.hbm %s1, %s147
          %s149 = sshll.u32 %s142, 4
          %s150 = int_to_ptr.vmem [resolvable:$true] %s149
          %155 = dma.hbm_to_vmem [thread:$0]  %s148, 256, %s150, %s139, 128, 128, 8
        $region24: #{tpu_custom_call.1} parent=15 // pred_fallthru
          _
      $region16: #{tpu_custom_call.1} parent=5 // pred_fallthru
        _
      %p156 = scmp.le.s32.totalorder 1, %s17
      %p157 = scmp.lt.s32.totalorder %s17, 9
      %p158 = pnand %p156, %p157
      %p159 = pneg %p158
      // Predicated region
      $region25: #{tpu_custom_call.1} parent=5 // pred_check
        _
      $region26: #{tpu_custom_call.1} parent=5 // pred_check_branch
        %161 = sbr.rel (%p158) target = $region28
      $region27: #{tpu_custom_call.1} parent=5 // pred_region
        %s162 = ssub.s32 %s17, 1
        %s163 = sand.u32 %s30, 1
        %s164 = scalar_lea.sflag [#allocation3], %s163
        %s165 = sand.u32 %s30, 1
        %s166 = smul.addr %s165, 16
        %s167 = scalar_lea.vmem [#allocation2], %s166
        // Predicated region
        $region29: #{tpu_custom_call.1} parent=27 // pred_check
          %p168 = pneg %p43
        $region30: #{tpu_custom_call.1} parent=27 // pred_check_branch
          %170 = sbr.rel (%p168) target = $region32
        $region31: #{tpu_custom_call.1} parent=27 // pred_region
          %171 = dma.done %s164, 256
        $region32: #{tpu_custom_call.1} parent=27 // pred_fallthru
          _
        %s172 = sand.u32 %s56, 1
        %s173 = scalar_lea.sflag [#allocation6], %s172
        %s174 = sand.u32 %s56, 1
        %s175 = smul.addr %s174, 16
        %s176 = scalar_lea.vmem [#allocation5], %s175
        // Predicated region
        $region33: #{tpu_custom_call.1} parent=27 // pred_check
          %p177 = pneg %p69
        $region34: #{tpu_custom_call.1} parent=27 // pred_check_branch
          %179 = sbr.rel (%p177) target = $region36
        $region35: #{tpu_custom_call.1} parent=27 // pred_region
          %180 = dma.done %s173, 256
        $region36: #{tpu_custom_call.1} parent=27 // pred_fallthru
          _
        %s181 = sand.u32 %s30, 1
        %s182 = scalar_lea.sflag [#allocation3], %s181
        %s183 = sand.u32 %s30, 1
        %s184 = smul.addr %s183, 16
        %s185 = scalar_lea.vmem [#allocation2], %s184
        %p186 = pneg %p43
        %p187 = pneg %p40
        %s188 = sand.u32 %s56, 1
        %s189 = scalar_lea.sflag [#allocation6], %s188
        %s190 = sand.u32 %s56, 1
        %s191 = smul.addr %s190, 16
        %s192 = scalar_lea.vmem [#allocation5], %s191
        %p193 = pneg %p69
        %p194 = pneg %p66
        %p195 = pneg %p95
        %p196 = pneg %p92
        %s197 = sand.u32 %s82, 1
        %s198 = scalar_lea.sflag [#allocation4], %s197
        %s199 = sand.u32 %s82, 1
        %s200 = smul.addr %s199, 16
        %s201 = scalar_lea.vmem [#allocation7], %s200
        %v202 = vld [vmem:[%s167] sm:$0xff]
        %v203 = vld [vmem:[%s167 + $0x8] sm:$0xff]
        %v204 = vld [vmem:[%s176] sm:$0xff]
        %v205 = vld [vmem:[%s176 + $0x8] sm:$0xff]
        %v206 = vlaneseq
        %v207 = vand.u32 %v206, 127
        %v208 = vlaneseq
        %v209 = vshrl.u32 %v208, 7
        %v210 = vadd.s32 %v209, 8
        %vm211 = vcmp.eq.s32.totalorder %v207, 0
        %vm212 = vcmp.eq.s32.totalorder %v207, 15
        %vm213 = vcmp.eq.s32.totalorder %v209, 0
        %vm214 = vcmp.eq.s32.totalorder %v210, 0
        %vm215 = vcmp.eq.s32.totalorder %v209, 15
        %vm216 = vcmp.eq.s32.totalorder %v210, 15
        %vm217 = vcmask 1047680
        %218 = vrot.lane.b32.xlu0 %v202, 16
        %v219 = vpop.permute.xlu0 %218
        %v220 = vsel %vm217, %v219, %v202
        %221 = vrot.lane.b32.xlu0 %v203, 16
        %v222 = vpop.permute.xlu0 %221
        %v223 = vsel %vm217, %v222, %v203
        %224 = vrot.lane.b32.xlu0 %v220, 16
        %v225 = vpop.permute.xlu0 %224
        %226 = vrot.lane.b32.xlu0 %v223, 16
        %v227 = vpop.permute.xlu0 %226
        %v228 = vsel %vm217, %v225, %v202
        %v229 = vsel %vm217, %v227, %v203
        %232 = vrot.lane.b32.xlu0 %v228, 127
        %v233 = vpop.permute.xlu0 %232
        %234 = vrot.lane.b32.xlu0 %v229, 127
        %v235 = vpop.permute.xlu0 %234
        %238 = vrot.lane.b32.xlu0 %v228, 113
        %v239 = vpop.permute.xlu0 %238
        %240 = vrot.lane.b32.xlu0 %v229, 113
        %v241 = vpop.permute.xlu0 %240
        %v244 = vsel %vm211, %v233, %v239
        %v245 = vsel %vm211, %v235, %v241
        %v246 = vsel %vm212, %v239, %v233
        %v247 = vsel %vm212, %v241, %v235
        %v248 = vadd.f32 %v202, %v244
        %v249 = vadd.f32 %v203, %v245
        %v250 = vadd.f32 %v248, %v246
        %v251 = vadd.f32 %v249, %v247
        %v252 = vrot.slane %v250, 7
        %v253 = vrot.slane %v251, 7
        %vm254 = vcmp.lt.s32.totalorder %v209, 1
        %v255 = vsel %vm254, %v252, %v253
        %v256 = vsel %vm254, %v253, %v252
        %v257 = vrot.slane %v250, 1
        %v258 = vrot.slane %v251, 1
        %vm259 = vcmp.lt.s32.totalorder %v209, 7
        %v260 = vsel %vm259, %v257, %v258
        %v261 = vsel %vm259, %v258, %v257
        %v262 = vsel %vm213, %v260, %v256
        %v263 = vsel %vm214, %v261, %v255
        %v264 = vsel %vm215, %v256, %v260
        %v265 = vsel %vm216, %v255, %v261
        %v266 = vadd.f32 %v250, %v262
        %v267 = vadd.f32 %v251, %v263
        %v268 = vadd.f32 %v266, %v264
        %v269 = vadd.f32 %v267, %v265
        %270 = vrot.lane.b32.xlu0 %v204, 16
        %v271 = vpop.permute.xlu0 %270
        %v272 = vsel %vm217, %v271, %v204
        %273 = vrot.lane.b32.xlu0 %v205, 16
        %v274 = vpop.permute.xlu0 %273
        %v275 = vsel %vm217, %v274, %v205
        %276 = vrot.lane.b32.xlu0 %v272, 16
        %v277 = vpop.permute.xlu0 %276
        %278 = vrot.lane.b32.xlu0 %v275, 16
        %v279 = vpop.permute.xlu0 %278
        %v280 = vsel %vm217, %v277, %v204
        %v281 = vsel %vm217, %v279, %v205
        %284 = vrot.lane.b32.xlu0 %v280, 127
        %v285 = vpop.permute.xlu0 %284
        %286 = vrot.lane.b32.xlu0 %v281, 127
        %v287 = vpop.permute.xlu0 %286
        %290 = vrot.lane.b32.xlu0 %v280, 113
        %v291 = vpop.permute.xlu0 %290
        %292 = vrot.lane.b32.xlu0 %v281, 113
        %v293 = vpop.permute.xlu0 %292
        %v296 = vsel %vm211, %v285, %v291
        %v297 = vsel %vm211, %v287, %v293
        %v298 = vsel %vm212, %v291, %v285
        %v299 = vsel %vm212, %v293, %v287
        %v300 = vadd.f32 %v204, %v296
        %v301 = vadd.f32 %v205, %v297
        %v302 = vadd.f32 %v300, %v298
        %v303 = vadd.f32 %v301, %v299
        %v304 = vrot.slane %v302, 7
        %v305 = vrot.slane %v303, 7
        %v306 = vsel %vm254, %v304, %v305
        %v307 = vsel %vm254, %v305, %v304
        %v308 = vrot.slane %v302, 1
        %v309 = vrot.slane %v303, 1
        %v310 = vsel %vm259, %v308, %v309
        %v311 = vsel %vm259, %v309, %v308
        %v312 = vsel %vm213, %v310, %v307
        %v313 = vsel %vm214, %v311, %v306
        %v314 = vsel %vm215, %v307, %v310
        %v315 = vsel %vm216, %v306, %v311
        %v316 = vadd.f32 %v302, %v312
        %v317 = vadd.f32 %v303, %v313
        %v318 = vadd.f32 %v316, %v314
        %v319 = vadd.f32 %v317, %v315
        %v320 = vmul.f32 %v202, %v202
        %v321 = vmul.f32 %v203, %v203
        %322 = vrot.lane.b32.xlu0 %v320, 16
        %v323 = vpop.permute.xlu0 %322
        %v324 = vsel %vm217, %v323, %v320
        %325 = vrot.lane.b32.xlu0 %v321, 16
        %v326 = vpop.permute.xlu0 %325
        %v327 = vsel %vm217, %v326, %v321
        %328 = vrot.lane.b32.xlu0 %v324, 16
        %v329 = vpop.permute.xlu0 %328
        %330 = vrot.lane.b32.xlu0 %v327, 16
        %v331 = vpop.permute.xlu0 %330
        %v332 = vsel %vm217, %v329, %v320
        %v333 = vsel %vm217, %v331, %v321
        %336 = vrot.lane.b32.xlu0 %v332, 127
        %v337 = vpop.permute.xlu0 %336
        %338 = vrot.lane.b32.xlu0 %v333, 127
        %v339 = vpop.permute.xlu0 %338
        %342 = vrot.lane.b32.xlu0 %v332, 113
        %v343 = vpop.permute.xlu0 %342
        %344 = vrot.lane.b32.xlu0 %v333, 113
        %v345 = vpop.permute.xlu0 %344
        %v348 = vsel %vm211, %v337, %v343
        %v349 = vsel %vm211, %v339, %v345
        %v350 = vsel %vm212, %v343, %v337
        %v351 = vsel %vm212, %v345, %v339
        %v352 = vadd.f32 %v320, %v348
        %v353 = vadd.f32 %v321, %v349
        %v354 = vadd.f32 %v352, %v350
        %v355 = vadd.f32 %v353, %v351
        %v356 = vrot.slane %v354, 7
        %v357 = vrot.slane %v355, 7
        %v358 = vsel %vm254, %v356, %v357
        %v359 = vsel %vm254, %v357, %v356
        %v360 = vrot.slane %v354, 1
        %v361 = vrot.slane %v355, 1
        %v362 = vsel %vm259, %v360, %v361
        %v363 = vsel %vm259, %v361, %v360
        %v364 = vsel %vm213, %v362, %v359
        %v365 = vsel %vm214, %v363, %v358
        %v366 = vsel %vm215, %v359, %v362
        %v367 = vsel %vm216, %v358, %v363
        %v368 = vadd.f32 %v354, %v364
        %v369 = vadd.f32 %v355, %v365
        %v370 = vadd.f32 %v368, %v366
        %v371 = vadd.f32 %v369, %v367
        %v372 = vmul.f32 %v204, %v204
        %v373 = vmul.f32 %v205, %v205
        %374 = vrot.lane.b32.xlu0 %v372, 16
        %v375 = vpop.permute.xlu0 %374
        %v376 = vsel %vm217, %v375, %v372
        %377 = vrot.lane.b32.xlu0 %v373, 16
        %v378 = vpop.permute.xlu0 %377
        %v379 = vsel %vm217, %v378, %v373
        %380 = vrot.lane.b32.xlu0 %v376, 16
        %v381 = vpop.permute.xlu0 %380
        %382 = vrot.lane.b32.xlu0 %v379, 16
        %v383 = vpop.permute.xlu0 %382
        %v384 = vsel %vm217, %v381, %v372
        %v385 = vsel %vm217, %v383, %v373
        %388 = vrot.lane.b32.xlu0 %v384, 127
        %v389 = vpop.permute.xlu0 %388
        %390 = vrot.lane.b32.xlu0 %v385, 127
        %v391 = vpop.permute.xlu0 %390
        %394 = vrot.lane.b32.xlu0 %v384, 113
        %v395 = vpop.permute.xlu0 %394
        %396 = vrot.lane.b32.xlu0 %v385, 113
        %v397 = vpop.permute.xlu0 %396
        %v400 = vsel %vm211, %v389, %v395
        %v401 = vsel %vm211, %v391, %v397
        %v402 = vsel %vm212, %v395, %v389
        %v403 = vsel %vm212, %v397, %v391
        %v404 = vadd.f32 %v372, %v400
        %v405 = vadd.f32 %v373, %v401
        %v406 = vadd.f32 %v404, %v402
        %v407 = vadd.f32 %v405, %v403
        %v408 = vrot.slane %v406, 7
        %v409 = vrot.slane %v407, 7
        %v410 = vsel %vm254, %v408, %v409
        %v411 = vsel %vm254, %v409, %v408
        %v412 = vrot.slane %v406, 1
        %v413 = vrot.slane %v407, 1
        %v414 = vsel %vm259, %v412, %v413
        %v415 = vsel %vm259, %v413, %v412
        %v416 = vsel %vm213, %v414, %v411
        %v417 = vsel %vm214, %v415, %v410
        %v418 = vsel %vm215, %v411, %v414
        %v419 = vsel %vm216, %v410, %v415
        %v420 = vadd.f32 %v406, %v416
        %v421 = vadd.f32 %v407, %v417
        %v422 = vadd.f32 %v420, %v418
        %v423 = vadd.f32 %v421, %v419
        %v424 = vmul.f32 %v202, %v204
        %v425 = vmul.f32 %v203, %v205
        %426 = vrot.lane.b32.xlu0 %v424, 16
        %v427 = vpop.permute.xlu0 %426
        %v428 = vsel %vm217, %v427, %v424
        %429 = vrot.lane.b32.xlu0 %v425, 16
        %v430 = vpop.permute.xlu0 %429
        %v431 = vsel %vm217, %v430, %v425
        %432 = vrot.lane.b32.xlu0 %v428, 16
        %v433 = vpop.permute.xlu0 %432
        %434 = vrot.lane.b32.xlu0 %v431, 16
        %v435 = vpop.permute.xlu0 %434
        %v436 = vsel %vm217, %v433, %v424
        %v437 = vsel %vm217, %v435, %v425
        %440 = vrot.lane.b32.xlu0 %v436, 127
        %v441 = vpop.permute.xlu0 %440
        %442 = vrot.lane.b32.xlu0 %v437, 127
        %v443 = vpop.permute.xlu0 %442
        %446 = vrot.lane.b32.xlu0 %v436, 113
        %v447 = vpop.permute.xlu0 %446
        %448 = vrot.lane.b32.xlu0 %v437, 113
        %v449 = vpop.permute.xlu0 %448
        %v452 = vsel %vm211, %v441, %v447
        %v453 = vsel %vm211, %v443, %v449
        %v454 = vsel %vm212, %v447, %v441
        %v455 = vsel %vm212, %v449, %v443
        %v456 = vadd.f32 %v424, %v452
        %v457 = vadd.f32 %v425, %v453
        %v458 = vadd.f32 %v456, %v454
        %v459 = vadd.f32 %v457, %v455
        %v460 = vrot.slane %v458, 7
        %v461 = vrot.slane %v459, 7
        %v462 = vsel %vm254, %v460, %v461
        %v463 = vsel %vm254, %v461, %v460
        %v464 = vrot.slane %v458, 1
        %v465 = vrot.slane %v459, 1
        %v466 = vsel %vm259, %v464, %v465
        %v467 = vsel %vm259, %v465, %v464
        %v468 = vsel %vm213, %v466, %v463
        %v469 = vsel %vm214, %v467, %v462
        %v470 = vsel %vm215, %v463, %v466
        %v471 = vsel %vm216, %v462, %v467
        %v472 = vadd.f32 %v458, %v468
        %v473 = vadd.f32 %v459, %v469
        %v474 = vadd.f32 %v472, %v470
        %v475 = vadd.f32 %v473, %v471
        %v476 = vmul.f32 %v268, %v318
        %v477 = vmul.f32 %v269, %v319
        %v478 = vmul.f32 %v268, %v268
        %v479 = vmul.f32 %v269, %v269
        %v480 = vmul.f32 %v318, %v318
        %v481 = vmul.f32 %v319, %v319
        %v482 = vmul.f32 %v476, 2.0
        %v483 = vmul.f32 %v477, 2.0
        %v484 = vadd.f32 %v482, 0.0081
        %v485 = vadd.f32 %v483, 0.0081
        %v486 = vmul.f32 %v474, 18.0
        %v487 = vmul.f32 %v475, 18.0
        %v488 = vsub.f32 %v486, %v482
        %v489 = vsub.f32 %v487, %v483
        %v490 = vadd.f32 %v488, 0.0729
        %v491 = vadd.f32 %v489, 0.0729
        %v492 = vmul.f32 %v484, %v490
        %v493 = vmul.f32 %v485, %v491
        %v494 = vadd.f32 %v478, %v480
        %v495 = vadd.f32 %v479, %v481
        %v496 = vadd.f32 %v494, 0.0081
        %v497 = vadd.f32 %v495, 0.0081
        %v498 = vadd.f32 %v370, %v422
        %v499 = vadd.f32 %v371, %v423
        %v500 = vmul.f32 %v498, 9.0
        %v501 = vmul.f32 %v499, 9.0
        %v502 = vsub.f32 %v500, %v478
        %v503 = vsub.f32 %v501, %v479
        %v504 = vsub.f32 %v502, %v480
        %v505 = vsub.f32 %v503, %v481
        %v506 = vadd.f32 %v504, 0.0729
        %v507 = vadd.f32 %v505, 0.0729
        %v508 = vmul.f32 %v496, %v506
        %v509 = vmul.f32 %v497, %v507
        %v510 = vrcp.pop %v508
        %v511 = vrcp.pop %v509
        %v512 = vmul.f32 %v508, %v510
        %v513 = vmul.f32 %v509, %v511
        %v514 = vsub.f32 2.0, %v512
        %v515 = vsub.f32 2.0, %v513
        %v516 = vmul.f32 %v510, %v514
        %v517 = vmul.f32 %v511, %v515
        %v518 = vmul.f32 %v492, %v516
        %v519 = vmul.f32 %v493, %v517
        %v520 = vsub.f32 1.0, %v518
        %v521 = vsub.f32 1.0, %v519
        %v522 = vmul.f32 %v520, 0.5
        %v523 = vmul.f32 %v521, 0.5
        %v524 = vmax.f32 %v522, 0.0
        %v525 = vmax.f32 %v523, 0.0
        %v526 = vmin.f32 %v524, 1.0
        %v527 = vmin.f32 %v525, 1.0
        %vm528 = vcmask 130048
        %529 = vst.msk [vmem:[%s201] sm:$0xff] %vm528, %v526
        %530 = vst.msk [vmem:[%s201 + $0x8] sm:$0xff] %vm528, %v527
        %s531 = sand.u32 %s82, 1
        %s532 = scalar_lea.sflag [#allocation4], %s531
        %s533 = sand.u32 %s82, 1
        %s534 = smul.addr %s533, 16
        %s535 = scalar_lea.vmem [#allocation7], %s534
        // Predicated region
        $region37: #{tpu_custom_call.1} parent=27 // pred_check
          %p536 = pneg %p92
        $region38: #{tpu_custom_call.1} parent=27 // pred_check_branch
          %538 = sbr.rel (%p536) target = $region40
        $region39: #{tpu_custom_call.1} parent=27 // pred_region
          %s540 = ssub.s32 256, 256
          %541 = vsyncadd %s532, %s540
          %s542 = smul.addr %s22, 2
          %s543 = smul.addr %s542, 128
          %s544 = scalar_lea.hbm %s2, %s543
          %s545 = sshll.u32 %s535, 4
          %s546 = int_to_ptr.vmem [resolvable:$true] %s545
          %551 = dma.vmem_to_hbm [thread:$0]  %s546, 256, %s544, %s532, 128, 128, 8
        $region40: #{tpu_custom_call.1} parent=27 // pred_fallthru
          _
      $region28: #{tpu_custom_call.1} parent=5 // pred_fallthru
        _
      %p552 = scmp.le.s32.totalorder 2, %s17
      // Predicated region
      $region41: #{tpu_custom_call.1} parent=5 // pred_check
        %p553 = pneg %p552
      $region42: #{tpu_custom_call.1} parent=5 // pred_check_branch
        %555 = sbr.rel (%p553) target = $region44
      $region43: #{tpu_custom_call.1} parent=5 // pred_region
        %s556 = ssub.s32 %s17, 2
        // Predicated region
        $region45: #{tpu_custom_call.1} parent=43 // pred_check
          %p557 = pneg %p98
        $region46: #{tpu_custom_call.1} parent=43 // pred_check_branch
          %559 = sbr.rel (%p557) target = $region48
        $region47: #{tpu_custom_call.1} parent=43 // pred_region
          %s560 = sand.u32 %s83, 1
          %s561 = scalar_lea.sflag [#allocation4], %s560
          %s562 = sand.u32 %s83, 1
          %s563 = smul.addr %s562, 16
          %s564 = scalar_lea.vmem [#allocation7], %s563
          %565 = dma.done %s561, 256
        $region48: #{tpu_custom_call.1} parent=43 // pred_fallthru
          _
      $region44: #{tpu_custom_call.1} parent=5 // pred_fallthru
        _
    $region6: #{tpu_custom_call.1} parent=1 // loop_footer
      %s21 = sadd.s32 1, %s17
    $region7: #{tpu_custom_call.1} parent=1 // loop_footer_branch
      %16 = sbr.rel target = $region3
    $region8: #{tpu_custom_call.1} parent=1 // loop_exit
      _
    %566 = vsyncpa [#allocation3], 1
    %s567 = scalar_lea.sflag [#allocation3], 1
    %568 = vsyncpa %s567, 1
    %569 = vsyncpa [#allocation6], 1
    %s570 = scalar_lea.sflag [#allocation6], 1
    %571 = vsyncpa %s570, 1
    %572 = vsyncpa [#allocation4], 1
    %s573 = scalar_lea.sflag [#allocation4], 1
    %574 = vsyncpa %s573, 1

</llo_original>
